<compile_context>
chip_gen: v7x
topology: tpu7x:2x2x1
jax: 0.10.0
libtpu: 0.0.40
codegen_flags: <defaults>
</compile_context>

<pallas_src>
import functools
import math

import jax
import jax.numpy as jnp
from jax.experimental import pallas as pl
from jax.experimental.pallas import tpu as pltpu

K = 5      # conv kernel size
PAD = 2    # conv padding ('same' for k=5, stride=1)


# ---------------------------------------------------------------------------
# Small helpers
# ---------------------------------------------------------------------------
def _vmem_capacity_bytes():
    try:
        return int(pltpu.get_tpu_info().vmem_capacity_bytes)
    except Exception:
        return 64 * 1024 * 1024            # conservative default (v7x per-core)


def _vmem_limit_bytes():
    # Scoped-VMEM ceiling derived per generation (v5e/v6e: 128 MiB phys -> 96 MiB,
    # v7x: 64 MiB phys -> 48 MiB) instead of a hard-coded 48 MiB.
    cap = _vmem_capacity_bytes()
    return max(24 << 20, min(96 << 20, int(cap * 0.75)))


def _divisors_desc(n):
    small, large = [], []
    d = 1
    while d * d <= n:
        if n % d == 0:
            small.append(d)
            if d != n // d:
                large.append(n // d)
        d += 1
    return sorted(small + large, reverse=True)


def _lcm(a, b):
    return a * b // math.gcd(a, b)


def _mish(x):
    # torch Mish: x * tanh(softplus(x)); softplus threshold = 20
    sp = jnp.where(x > 20.0, x, jnp.log1p(jnp.exp(jnp.minimum(x, 20.0))))
    return x * jnp.tanh(sp)


def _tap_sums(colsum, r0, r1, rm2, rm1):
    # Column sums of the five shifted windows of the k=5 / pad=2 'same' conv
    # (valid for T >= 2), packed as one (bb, K*D) operand so the five per-tap
    # matmuls collapse into a single MXU contraction.
    return jnp.concatenate(
        [colsum - rm2 - rm1,        # tap 0
         colsum - rm1,              # tap 1
         colsum,                    # tap 2
         colsum - r0,               # tap 3
         colsum - r0 - r1],         # tap 4
        axis=-1)


def _film_params(s, t_row, cw, cb, lw, lb, inv_t):
    # s: (bb, K*D) tap sums.  Returns (bb, 2D) = [w | b] of the FiLM modulation.
    mean_c = jnp.dot(s, cw, preferred_element_type=jnp.float32) * inv_t + cb
    tt = t_row + mean_c
    return jnp.dot(_mish(tt), lw, preferred_element_type=jnp.float32) + lb


def _const_specs(shapes, single_buffer):
    # BlockSpecs for grid-invariant (constant) operands.  For big weights drop
    # to a single VMEM buffer (Pallas double-buffers by default even when the
    # block index never changes), which matters on v7x's 64 MiB VMEM.
    specs = []
    for shp in shapes:
        zeros = (0,) * len(shp)
        if single_buffer:
            specs.append(pl.BlockSpec(shp, lambda *_, z=zeros: z,
                                      pipeline_mode=pl.Buffered(1)))
        else:
            specs.append(pl.BlockSpec(shp, lambda *_, z=zeros: z))
    return specs


# ---------------------------------------------------------------------------
# Fused single-pass kernel: one HBM read of x, one write of out, per block.
# ---------------------------------------------------------------------------
def fused_kernel(x_ref, t_ref, cw_ref, cb_ref, lw_ref, lb_ref, o_ref, *, T, D):
    x = x_ref[...].astype(jnp.float32)                          # (bb, T, D)
    colsum = jnp.sum(x, axis=1)                                 # (bb, D)
    s = _tap_sums(colsum, x[:, 0, :], x[:, 1, :], x[:, T - 2, :], x[:, T - 1, :])
    lin = _film_params(s, t_ref[:, 0, :].astype(jnp.float32),
                       cw_ref[...].astype(jnp.float32),
                       cb_ref[...].astype(jnp.float32),
                       lw_ref[...].astype(jnp.float32),
                       lb_ref[...].astype(jnp.float32), 1.0 / T)
    w = lin[:, :D] + 1.0                                        # fold the +1 once
    b = lin[:, D:]
    o_ref[...] = (w[:, None, :] * x + b[:, None, :]).astype(o_ref.dtype)


# ---------------------------------------------------------------------------
# Fallback stage 1: per-batch FiLM params; column sum accumulated over T tiles.
# ---------------------------------------------------------------------------
def stats_kernel(x_ref, t_ref, e_ref, cw_ref, cb_ref, lw_ref, lb_ref,
                 wb_ref, colsum_sc, *, T):
    tj = pl.program_id(1)

    @pl.when(tj == 0)
    def _():
        colsum_sc[...] = jnp.zeros_like(colsum_sc)

    colsum_sc[...] += jnp.sum(x_ref[...].astype(jnp.float32), axis=1)

    @pl.when(tj == pl.num_programs(1) - 1)
    def _():
        e = e_ref[...].astype(jnp.float32)            # (bb, 4, D) = [r0, r1, rm2, rm1]
        s = _tap_sums(colsum_sc[...], e[:, 0, :], e[:, 1, :], e[:, 2, :], e[:, 3, :])
        lin = _film_params(s, t_ref[:, 0, :].astype(jnp.float32),
                           cw_ref[...].astype(jnp.float32),
                           cb_ref[...].astype(jnp.float32),
                           lw_ref[...].astype(jnp.float32),
                           lb_ref[...].astype(jnp.float32), 1.0 / T)
        wb_ref[...] = lin[:, None, :]


# ---------------------------------------------------------------------------
# Fallback stage 2: lane-dense FiLM pass  out = w1 * x + b  on a (B, T*D) view.
# wb_ref packs [tile(w+1) | tile(b)] so one side-input DMA stream is issued.
# ---------------------------------------------------------------------------
def film_kernel(x_ref, wb_ref, o_ref, *, lane_blk):
    x = x_ref[...].astype(jnp.float32)
    o_ref[...] = (wb_ref[:, :lane_blk] * x + wb_ref[:, lane_blk:]).astype(o_ref.dtype)


# ---------------------------------------------------------------------------
# Block pickers
# ---------------------------------------------------------------------------
def _pick_film_blocks(B, row, d, vmem_limit):
    # Target ~1-2 MiB per x block (measured tile sweep ~85% of HBM roofline);
    # footprint ~ 2*(x) + 2*(out) + 2*(2*wb) ~ 8 * blk must stay under the limit.
    target = min(2 << 20, max(256 << 10, (vmem_limit - (2 << 20)) // 8))
    unit = _lcm(d, 128)
    if row % unit == 0:
        lane_opts = [l for l in _divisors_desc(row) if l % unit == 0]
    else:
        lane_opts = [row]          # last resort: full row (always a multiple of d)
    if B >= 8:
        bb_opts = sorted({B} | {m for m in range(8, B + 1, 8) if B % m == 0},
                         reverse=True)
    else:
        bb_opts = [B]
    bb_min = bb_opts[-1]
    lane_blk = next((l for l in lane_opts if bb_min * l * 4 <= target), lane_opts[-1])
    bb = next((m for m in bb_opts if m * lane_blk * 4 <= target), bb_min)
    # keep >= 2 grid steps when possible so both v7x TensorCores get work
    if (B // bb) * (row // lane_blk) < 2:
        smaller_lane = [l for l in lane_opts if l < lane_blk]
        smaller_bb = [m for m in bb_opts if m < bb]
        if smaller_lane:
            lane_blk = smaller_lane[0]
        elif smaller_bb:
            bb = smaller_bb[0]
    return bb, lane_blk


# ---------------------------------------------------------------------------
# Wrappers
# ---------------------------------------------------------------------------
def _fused_forward(x_d, t, cw2, cb2, lw, lb2, vmem_limit, weight_bytes,
                   single_buf_weights):
    B, T, D = x_d.shape
    w_foot = weight_bytes * (1 if single_buf_weights else 2)
    margin = 2 << 20
    x_row_bytes = T * D * 4
    # footprint ~ 2*(x in) + 2*(out) + 1 temp  (+ weights + margin)
    max_x_block = (vmem_limit - w_foot - margin) // 5
    if max_x_block < x_row_bytes:
        return None                                  # does not fit -> two-stage path
    # Biggest batch block that fits, capped at ~8 MiB (already DMA-efficient),
    # preferring >= 2 grid steps so both v7x TensorCores get work.
    x_cap = min(max_x_block, max(8 << 20, x_row_bytes))
    divs = _divisors_desc(B)
    eligible = [d for d in divs if d * x_row_bytes <= x_cap]
    multi = [d for d in eligible if B // d >= 2]
    bb = (multi or eligible)[0]

    t3 = t.reshape(B, 1, D)
    w_specs = _const_specs([(K * D, D), (1, D), (D, 2 * D), (1, 2 * D)],
                           single_buf_weights)
    kern = functools.partial(fused_kernel, T=T, D=D)
    return pl.pallas_call(
        kern,
        out_shape=jax.ShapeDtypeStruct((B, T, D), x_d.dtype),
        grid=(B // bb,),
        in_specs=[pl.BlockSpec((bb, T, D), lambda i: (i, 0, 0)),
                  pl.BlockSpec((bb, 1, D), lambda i: (i, 0, 0))] + w_specs,
        out_specs=pl.BlockSpec((bb, T, D), lambda i: (i, 0, 0)),
        compiler_params=pltpu.CompilerParams(
            dimension_semantics=("parallel",),
            vmem_limit_bytes=int(vmem_limit)),
    )(x_d, t3, cw2, cb2, lw, lb2)


def _two_stage_forward(x_d, t, cw2, cb2, lw, lb2, vmem_limit,
                       single_buf_weights, t_tile_budget_bytes):
    B, T, D = x_d.shape

    # ---- stage 1: FiLM params; colsum accumulated over T tiles (bounded VMEM) --
    tt_opts = [d for d in _divisors_desc(T) if d % 8 == 0]
    tt = next((d for d in tt_opts if d * D * 4 <= t_tile_budget_bytes), None)
    if tt is None:
        # TODO(synk): mask a ragged last T tile instead of falling back to the
        # smallest 8-aligned divisor / full T for awkward (odd, huge) T.
        tt = tt_opts[-1] if tt_opts else T
    bb1 = next((d for d in _divisors_desc(B)
                if d * tt * D * 4 <= 2 * t_tile_budget_bytes), 1)

    edges = jnp.concatenate([x_d[:, 0:2, :], x_d[:, T - 2:T, :]], axis=1)  # r0,r1,rm2,rm1
    t3 = t.reshape(B, 1, D)
    w_specs = _const_specs([(K * D, D), (1, D), (D, 2 * D), (1, 2 * D)],
                           single_buf_weights)
    kern1 = functools.partial(stats_kernel, T=T)
    wb = pl.pallas_call(
        kern1,
        out_shape=jax.ShapeDtypeStruct((B, 1, 2 * D), jnp.float32),
        grid=(B // bb1, T // tt),
        in_specs=[pl.BlockSpec((bb1, tt, D), lambda i, j: (i, j, 0)),
                  pl.BlockSpec((bb1, 1, D), lambda i, j: (i, 0, 0)),
                  pl.BlockSpec((bb1, 4, D), lambda i, j: (i, 0, 0))] + w_specs,
        out_specs=pl.BlockSpec((bb1, 1, 2 * D), lambda i, j: (i, 0, 0)),
        scratch_shapes=[pltpu.VMEM((bb1, D), jnp.float32)],
        compiler_params=pltpu.CompilerParams(
            dimension_semantics=("parallel", "arbitrary"),
            vmem_limit_bytes=int(vmem_limit)),
    )(x_d, t3, edges, cw2, cb2, lw, lb2)

    w = wb[:, 0, :D] + 1.0           # fold the +1 once, outside the hot pass
    b = wb[:, 0, D:]

    # ---- stage 2: lane-dense FiLM pass over the (B, T*D) view -------------------
    row = T * D
    bb2, lane_blk = _pick_film_blocks(B, row, D, vmem_limit)
    reps = lane_blk // D
    wb_wide = jnp.concatenate([jnp.tile(w, (1, reps)), jnp.tile(b, (1, reps))],
                              axis=1)                     # (B, 2*lane_blk)
    x2 = x_d.reshape(B, row)
    kern2 = functools.partial(film_kernel, lane_blk=lane_blk)
    out2 = pl.pallas_call(
        kern2,
        out_shape=jax.ShapeDtypeStruct((B, row), x_d.dtype),
        grid=(B // bb2, row // lane_blk),
        in_specs=[pl.BlockSpec((bb2, lane_blk), lambda i, j: (i, j)),
                  pl.BlockSpec((bb2, 2 * lane_blk), lambda i, j: (i, 0))],
        out_specs=pl.BlockSpec((bb2, lane_blk), lambda i, j: (i, j)),
        compiler_params=pltpu.CompilerParams(
            dimension_semantics=("parallel", "parallel"),
            vmem_limit_bytes=int(vmem_limit)),
    )(x2, wb_wide)
    return out2.reshape(B, T, D)


def alignment_forward(x_d, t, conv_w, conv_b, lin_w, lin_b, *,
                      force_two_stage=False, t_tile_budget_bytes=2 << 20):
    """Pallas forward of AlignmentModule.

    Weight layout (for porting torch weights):
      conv_w: (K, D, D) == torch_conv.weight.permute(2, 1, 0)   [k, c_in, c_out]
      lin_w : (D, 2D)   == torch_linear.weight.T
    """
    B, T, D = x_d.shape
    assert T >= 2, "time axis must have at least 2 steps"
    cw2 = conv_w.reshape(K * D, D)        # fuse the 5 conv taps into one contraction
    cb2 = conv_b.reshape(1, D)
    lb2 = lin_b.reshape(1, 2 * D)

    vmem_limit = _vmem_limit_bytes()
    weight_bytes = sum(int(a.size) * a.dtype.itemsize for a in (cw2, cb2, lin_w, lb2))
    single_buf_weights = weight_bytes > (4 << 20)

    if not force_two_stage:
        out = _fused_forward(x_d, t, cw2, cb2, lin_w, lb2,
                             vmem_limit, weight_bytes, single_buf_weights)
        if out is not None:
            return out
    return _two_stage_forward(x_d, t, cw2, cb2, lin_w, lb2,
                              vmem_limit, single_buf_weights, t_tile_budget_bytes)


# ---------------------------------------------------------------------------
# Plain-JAX reference replicating the PyTorch forward.
# ---------------------------------------------------------------------------
def reference_forward(x_d, t, conv_w, conv_b, lin_w, lin_b):
    B, T, D = x_d.shape
    x_pad = jnp.pad(x_d, ((0, 0), (PAD, PAD), (0, 0)))
    conv = sum(jnp.einsum('btd,de->bte', x_pad[:, k:k + T, :], conv_w[k])
               for k in range(K)) + conv_b
    mean_c = conv.mean(axis=1)                      # (B, D)
    tt = t + mean_c
    mish = _mish(tt)
    lin = mish @ lin_w + lin_b                      # (B, 2D)
    w, b = lin[:, :D], lin[:, D:]
    return (w[:, None, :] + 1.0) * x_d + b[:, None, :]


if __name__ == "__main__":
    B, T, D = 2, 8, 32   # batch, seq, d_model

    key = jax.random.PRNGKey(0)
    k1, k2, k3, k4, k5, k6, k7, k8 = jax.random.split(key, 8)

    x_d = jax.random.normal(k1, (B, T, D), jnp.float32)
    t = jax.random.normal(k2, (B, D), jnp.float32)

    # Deterministic synthetic parameters (kernel layout; see port note above).
    conv_w = jax.random.normal(k3, (K, D, D), jnp.float32) * 0.1   # [k, c_in, c_out]
    conv_b = jax.random.normal(k4, (D,), jnp.float32) * 0.1
    lin_w = jax.random.normal(k5, (D, 2 * D), jnp.float32) * 0.1   # (in, out)
    lin_b = jax.random.normal(k6, (2 * D,), jnp.float32) * 0.1

    # Primary fused single-pass path.
    out = jax.block_until_ready(
        alignment_forward(x_d, t, conv_w, conv_b, lin_w, lin_b))
    ref = reference_forward(x_d, t, conv_w, conv_b, lin_w, lin_b)
    assert out.shape == (B, T, D)
    assert jnp.allclose(out, ref, atol=1e-3, rtol=1e-3), "fused path mismatch"

    # Also exercise the large-shape two-stage fallback (T-tiled stats +
    # lane-dense FiLM) on a small problem by forcing a tiny T-tile budget.
    T2 = 16
    x_d2 = jax.random.normal(k7, (B, T2, D), jnp.float32)
    t2 = jax.random.normal(k8, (B, D), jnp.float32)
    out2 = jax.block_until_ready(
        alignment_forward(x_d2, t2, conv_w, conv_b, lin_w, lin_b,
                          force_two_stage=True, t_tile_budget_bytes=1024))
    ref2 = reference_forward(x_d2, t2, conv_w, conv_b, lin_w, lin_b)
    assert jnp.allclose(out2, ref2, atol=1e-3, rtol=1e-3), "two-stage path mismatch"

    print("KERNEL_OK")
</pallas_src>

<mosaic_0001>
module attributes {stable_mosaic.version = 11 : i64} {
  func.func @fused_kernel(%arg0: i32, %arg1: memref<1x8x32xf32, #tpu.memory_space<vmem>>, %arg2: memref<1x1x32xf32, #tpu.memory_space<vmem>>, %arg3: memref<160x32xf32, #tpu.memory_space<vmem>>, %arg4: memref<1x32xf32, #tpu.memory_space<vmem>>, %arg5: memref<32x64xf32, #tpu.memory_space<vmem>>, %arg6: memref<1x64xf32, #tpu.memory_space<vmem>>, %arg7: memref<1x8x32xf32, #tpu.memory_space<vmem>>) attributes {dimension_semantics = [#tpu.dimension_semantics<parallel>], iteration_bounds = array<i64: 2>, scalar_prefetch = 0 : i64, scratch_operands = 0 : i64, tpu.core_type = #tpu.core_type<tc>, window_params = [{transform_indices = @transform_0, window_bounds = array<i64: 1, 8, 32>}, {transform_indices = @transform_1, window_bounds = array<i64: 1, 1, 32>}, {pipeline_mode = #tpu.pipeline_mode<synchronous>, transform_indices = @transform_2, window_bounds = array<i64: 160, 32>}, {pipeline_mode = #tpu.pipeline_mode<synchronous>, transform_indices = @transform_3, window_bounds = array<i64: 1, 32>}, {pipeline_mode = #tpu.pipeline_mode<synchronous>, transform_indices = @transform_4, window_bounds = array<i64: 32, 64>}, {pipeline_mode = #tpu.pipeline_mode<synchronous>, transform_indices = @transform_5, window_bounds = array<i64: 1, 64>}, {transform_indices = @transform_6, window_bounds = array<i64: 1, 8, 32>}]} {
    %c0 = arith.constant 0 : index
    %c0_0 = arith.constant 0 : index
    %c0_1 = arith.constant 0 : index
    %0 = vector.load %arg1[%c0, %c0_0, %c0_1] : memref<1x8x32xf32, #tpu.memory_space<vmem>>, vector<1x8x32xf32>
    %cst = arith.constant dense<0.000000e+00> : vector<1x32xf32>
    %1 = vector.multi_reduction <add>, %0, %cst [1] : vector<1x8x32xf32> to vector<1x32xf32>
    %2 = vector.extract_strided_slice %0 {offsets = [0, 0, 0], sizes = [1, 1, 32], strides = [1, 1, 1]} : vector<1x8x32xf32> to vector<1x1x32xf32>
    %3 = vector.shape_cast %2 : vector<1x1x32xf32> to vector<1x32xf32>
    %4 = vector.extract_strided_slice %0 {offsets = [0, 1, 0], sizes = [1, 1, 32], strides = [1, 1, 1]} : vector<1x8x32xf32> to vector<1x1x32xf32>
    %5 = vector.shape_cast %4 : vector<1x1x32xf32> to vector<1x32xf32>
    %6 = vector.extract_strided_slice %0 {offsets = [0, 6, 0], sizes = [1, 1, 32], strides = [1, 1, 1]} : vector<1x8x32xf32> to vector<1x1x32xf32>
    %7 = vector.shape_cast %6 : vector<1x1x32xf32> to vector<1x32xf32>
    %8 = vector.extract_strided_slice %0 {offsets = [0, 7, 0], sizes = [1, 1, 32], strides = [1, 1, 1]} : vector<1x8x32xf32> to vector<1x1x32xf32>
    %9 = vector.shape_cast %8 : vector<1x1x32xf32> to vector<1x32xf32>
    %10 = arith.subf %1, %7 : vector<1x32xf32>
    %11 = arith.subf %10, %9 : vector<1x32xf32>
    %12 = arith.subf %1, %9 : vector<1x32xf32>
    %13 = arith.subf %1, %3 : vector<1x32xf32>
    %14 = arith.subf %1, %3 : vector<1x32xf32>
    %15 = arith.subf %14, %5 : vector<1x32xf32>
    %16 = tpu.concatenate %11, %12, %1, %13, %15 in 1 : vector<1x32xf32>, vector<1x32xf32>, vector<1x32xf32>, vector<1x32xf32>, vector<1x32xf32> -> vector<1x160xf32>
    %c0_2 = arith.constant 0 : index
    %c0_3 = arith.constant 0 : index
    %c0_4 = arith.constant 0 : index
    %17 = vector.load %arg2[%c0_2, %c0_3, %c0_4] : memref<1x1x32xf32, #tpu.memory_space<vmem>>, vector<1x1x32xf32>
    %18 = vector.shape_cast %17 : vector<1x1x32xf32> to vector<1x32xf32>
    %c0_5 = arith.constant 0 : index
    %c0_6 = arith.constant 0 : index
    %19 = vector.load %arg3[%c0_5, %c0_6] : memref<160x32xf32, #tpu.memory_space<vmem>>, vector<160x32xf32>
    %c0_7 = arith.constant 0 : index
    %c0_8 = arith.constant 0 : index
    %20 = vector.load %arg4[%c0_7, %c0_8] : memref<1x32xf32, #tpu.memory_space<vmem>>, vector<1x32xf32>
    %c0_9 = arith.constant 0 : index
    %c0_10 = arith.constant 0 : index
    %21 = vector.load %arg5[%c0_9, %c0_10] : memref<32x64xf32, #tpu.memory_space<vmem>>, vector<32x64xf32>
    %c0_11 = arith.constant 0 : index
    %c0_12 = arith.constant 0 : index
    %22 = vector.load %arg6[%c0_11, %c0_12] : memref<1x64xf32, #tpu.memory_space<vmem>>, vector<1x64xf32>
    %cst_13 = arith.constant dense<0.000000e+00> : vector<1x32xf32>
    %23 = tpu.matmul %16, %19, %cst_13 {dimension_numbers = #tpu.dot_dimension_numbers<[1], [0], [0], [1], [0, 0, 1, 1], [], []>} : vector<1x160xf32>, vector<160x32xf32>, vector<1x32xf32> -> vector<1x32xf32>
    %cst_14 = arith.constant 1.250000e-01 : f32
    %24 = vector.broadcast %cst_14 : f32 to vector<1x32xf32>
    %25 = arith.mulf %23, %24 : vector<1x32xf32>
    %26 = arith.addf %25, %20 : vector<1x32xf32>
    %27 = arith.addf %18, %26 : vector<1x32xf32>
    %cst_15 = arith.constant 2.000000e+01 : f32
    %28 = vector.broadcast %cst_15 : f32 to vector<1x32xf32>
    %29 = arith.cmpf ogt, %27, %28 : vector<1x32xf32>
    %cst_16 = arith.constant 2.000000e+01 : f32
    %30 = vector.broadcast %cst_16 : f32 to vector<1x32xf32>
    %31 = arith.minimumf %27, %30 : vector<1x32xf32>
    %32 = math.exp %31 : vector<1x32xf32>
    %33 = math.log1p %32 : vector<1x32xf32>
    %34 = arith.select %29, %27, %33 : vector<1x32xi1>, vector<1x32xf32>
    %35 = math.tanh %34 : vector<1x32xf32>
    %36 = arith.mulf %27, %35 : vector<1x32xf32>
    %cst_17 = arith.constant dense<0.000000e+00> : vector<1x64xf32>
    %37 = tpu.matmul %36, %21, %cst_17 {dimension_numbers = #tpu.dot_dimension_numbers<[1], [0], [0], [1], [0, 0, 1, 1], [], []>} : vector<1x32xf32>, vector<32x64xf32>, vector<1x64xf32> -> vector<1x64xf32>
    %38 = arith.addf %37, %22 : vector<1x64xf32>
    %39 = vector.extract_strided_slice %38 {offsets = [0, 0], sizes = [1, 32], strides = [1, 1]} : vector<1x64xf32> to vector<1x32xf32>
    %cst_18 = arith.constant 1.000000e+00 : f32
    %40 = vector.broadcast %cst_18 : f32 to vector<1x32xf32>
    %41 = arith.addf %39, %40 : vector<1x32xf32>
    %42 = vector.extract_strided_slice %38 {offsets = [0, 32], sizes = [1, 32], strides = [1, 1]} : vector<1x64xf32> to vector<1x32xf32>
    %43 = vector.shape_cast %41 : vector<1x32xf32> to vector<1x1x32xf32>
    %44 = vector.broadcast %43 : vector<1x1x32xf32> to vector<1x8x32xf32>
    %45 = arith.mulf %44, %0 : vector<1x8x32xf32>
    %46 = vector.shape_cast %42 : vector<1x32xf32> to vector<1x1x32xf32>
    %47 = vector.broadcast %46 : vector<1x1x32xf32> to vector<1x8x32xf32>
    %48 = arith.addf %45, %47 : vector<1x8x32xf32>
    %c0_19 = arith.constant 0 : index
    %c0_20 = arith.constant 0 : index
    %c0_21 = arith.constant 0 : index
    %49 = vector.load %arg7[%c0_19, %c0_20, %c0_21] : memref<1x8x32xf32, #tpu.memory_space<vmem>>, vector<1x8x32xf32>
    tpu.vector_store %arg7[%c0_19, %c0_20, %c0_21], %48 {strides = array<i32>} : memref<1x8x32xf32, #tpu.memory_space<vmem>>, vector<1x8x32xf32>,
    return
  }
  func.func @transform_0(%arg0: i32) -> (i32, i32, i32) {
    %c0_i32 = arith.constant 0 : i32
    %c0_i32_0 = arith.constant 0 : i32
    %c0_i32_1 = arith.constant 0 : i32
    return %arg0, %c0_i32, %c0_i32_0 : i32, i32, i32
  }
  func.func @transform_1(%arg0: i32) -> (i32, i32, i32) {
    %c0_i32 = arith.constant 0 : i32
    %c0_i32_0 = arith.constant 0 : i32
    %c0_i32_1 = arith.constant 0 : i32
    return %arg0, %c0_i32, %c0_i32_0 : i32, i32, i32
  }
  func.func @transform_2(%arg0: i32) -> (i32, i32) {
    %c0_i32 = arith.constant 0 : i32
    %c0_i32_0 = arith.constant 0 : i32
    %c0_i32_1 = arith.constant 0 : i32
    return %c0_i32, %c0_i32_0 : i32, i32
  }
  func.func @transform_3(%arg0: i32) -> (i32, i32) {
    %c0_i32 = arith.constant 0 : i32
    %c0_i32_0 = arith.constant 0 : i32
    %c0_i32_1 = arith.constant 0 : i32
    return %c0_i32, %c0_i32_0 : i32, i32
  }
  func.func @transform_4(%arg0: i32) -> (i32, i32) {
    %c0_i32 = arith.constant 0 : i32
    %c0_i32_0 = arith.constant 0 : i32
    %c0_i32_1 = arith.constant 0 : i32
    return %c0_i32, %c0_i32_0 : i32, i32
  }
  func.func @transform_5(%arg0: i32) -> (i32, i32) {
    %c0_i32 = arith.constant 0 : i32
    %c0_i32_0 = arith.constant 0 : i32
    %c0_i32_1 = arith.constant 0 : i32
    return %c0_i32, %c0_i32_0 : i32, i32
  }
  func.func @transform_6(%arg0: i32) -> (i32, i32, i32) {
    %c0_i32 = arith.constant 0 : i32
    %c0_i32_0 = arith.constant 0 : i32
    %c0_i32_1 = arith.constant 0 : i32
    return %arg0, %c0_i32, %c0_i32_0 : i32, i32, i32
  }
}

</mosaic_0001>

<llo_original>
// kernel: tpu_custom_call.1
$region0: #{tpu_custom_call.1}
  #allocation0 [shape = 'u32[]', space=smem, size = 0x4, offset = 0x4, fixed_abs, tag = 'smem constant byte address 0x4 - core index']
  #allocation1 [shape = 'u32[144,128]{1,0:T(1,128)}', space=vmem, size = 0x12000, scoped, tag = 'internal scratch']
  %s0 = inlined_call_operand.vmem [shape: f32[2,8,32], index: 0, kind: input, shape index: {}]
  %s1 = inlined_call_operand.vmem [shape: f32[2,1,32], index: 1, kind: input, shape index: {}]
  %s2 = inlined_call_operand.vmem [shape: f32[160,32], index: 2, kind: input, shape index: {}]
  %s3 = inlined_call_operand.vmem [shape: f32[1,32], index: 3, kind: input, shape index: {}]
  %s4 = inlined_call_operand.vmem [shape: f32[32,64], index: 4, kind: input, shape index: {}]
  %s5 = inlined_call_operand.vmem [shape: f32[1,64], index: 5, kind: input, shape index: {}]
  %s6 = inlined_call_operand.hbm [shape: f32[2,8,32], index: 6, kind: output, shape index: {}]
  %s7 = sld [smem:[#allocation0]]
  $region57: #{tpu_custom_call.1} parent=0
    _
  %s9 = ssub.s32 1, %s7
  %s10 = scalar_select 0, %s9, %s7
  $region1: #{tpu_custom_call.1} parent=0
    #allocation2 [shape = 'u8[8192]{0}', space=vmem, size = 0x2000, scoped, tag = 'output window, operand 0']
    #allocation3 [shape = 's32[2]{0}', space=sflag, size = 0x8, scoped, tag = 'scoped memory for tpu_custom_call.1']
    %11 = vsyncpa [#allocation3], 0
    %s12 = scalar_lea.sflag [#allocation3], 1
    %13 = vsyncpa %s12, 0
    loop: start=0, step=1, limit=4
    $region2: #{tpu_custom_call.1} parent=1 // loop_pre_header
      _
    $region3: #{tpu_custom_call.1} parent=1 // loop_header
      %s15 = sphi 0, %s19
      %p16 = scmp.ge.s32.totalorder %s15, 4
      %s25 = sphi 0, %s27
      %s28 = sphi 0, %s25
      %s29 = sphi 0, %s28
      %s45 = sphi 0, %s29
      %s51 = sphi 0, %s53
      %s54 = sphi 0, %s51
      %s55 = sphi 0, %s54
      %s71 = sphi 0, %s55
      %s75 = sphi 0, %s75
      %s77 = sphi 0, %s75
      %s78 = sphi 0, %s77
      %s92 = sphi 0, %s78
      %s96 = sphi 0, %s96
      %s98 = sphi 0, %s96
      %s99 = sphi 0, %s98
      %s113 = sphi 0, %s99
      %s117 = sphi 0, %s117
      %s119 = sphi 0, %s117
      %s120 = sphi 0, %s119
      %s134 = sphi 0, %s120
      %s138 = sphi 0, %s138
      %s140 = sphi 0, %s138
      %s141 = sphi 0, %s140
      %s155 = sphi 0, %s141
      %s161 = sphi 0, %s163
      %s164 = sphi 0, %s161
      %s165 = sphi 0, %s164
      %s181 = sphi 0, %s165
    $region4: #{tpu_custom_call.1} parent=1 // loop_header_branch
      %18 = sbr.rel (%p16) target = $region8
    $region5: #{tpu_custom_call.1} parent=1 // loop_body
      %s20 = ssub.s32 %s15, 1
      %s21 = ssub.s32 %s15, 2
      %s22 = sadd.s32 %s15, 1
      %s23 = ssub.s32 %s15, %s22
      %p24 = scmp.eq.s32.totalorder %s23, 0
      %s26 = sadd.s32 %s25, 1
      %s27 = scalar_select %p24, %s25, %s26
      %p30 = pneg %p24
      %p31 = scmp.eq.s32.totalorder %s15, 1
      %p32 = por %p30, %p31
      %p33 = scmp.ne.s32.totalorder %s25, %s28
      %p34 = scmp.eq.s32.totalorder %s15, 0
      %p35 = por %p33, %p34
      %p36 = scmp.ne.s32.totalorder %s25, %s28
      %p37 = scmp.eq.s32.totalorder %s20, 1
      %p38 = por %p36, %p37
      %p39 = scmp.ne.s32.totalorder %s28, %s29
      %p40 = scmp.eq.s32.totalorder %s20, 0
      %p41 = por %p39, %p40
      %p42 = scmp.ne.s32.totalorder %s28, %s29
      %p43 = scmp.eq.s32.totalorder %s21, 1
      %p44 = por %p42, %p43
      %p46 = scmp.ne.s32.totalorder %s29, %s45
      %p47 = scmp.eq.s32.totalorder %s21, 0
      %p48 = por %p46, %p47
      %s49 = ssub.s32 %s15, %s22
      %p50 = scmp.eq.s32.totalorder %s49, 0
      %s52 = sadd.s32 %s51, 1
      %s53 = scalar_select %p50, %s51, %s52
      %p56 = pneg %p50
      %p57 = scmp.eq.s32.totalorder %s15, 1
      %p58 = por %p56, %p57
      %p59 = scmp.ne.s32.totalorder %s51, %s54
      %p60 = scmp.eq.s32.totalorder %s15, 0
      %p61 = por %p59, %p60
      %p62 = scmp.ne.s32.totalorder %s51, %s54
      %p63 = scmp.eq.s32.totalorder %s20, 1
      %p64 = por %p62, %p63
      %p65 = scmp.ne.s32.totalorder %s54, %s55
      %p66 = scmp.eq.s32.totalorder %s20, 0
      %p67 = por %p65, %p66
      %p68 = scmp.ne.s32.totalorder %s54, %s55
      %p69 = scmp.eq.s32.totalorder %s21, 1
      %p70 = por %p68, %p69
      %p72 = scmp.ne.s32.totalorder %s55, %s71
      %p73 = scmp.eq.s32.totalorder %s21, 0
      %p74 = por %p72, %p73
      %s76 = sadd.s32 %s75, 1
      %p79 = scmp.eq.s32.totalorder %s15, 1
      %p80 = scmp.ne.s32.totalorder %s75, %s77
      %p81 = scmp.eq.s32.totalorder %s15, 0
      %p82 = por %p80, %p81
      %p83 = scmp.ne.s32.totalorder %s75, %s77
      %p84 = scmp.eq.s32.totalorder %s20, 1
      %p85 = por %p83, %p84
      %p86 = scmp.ne.s32.totalorder %s77, %s78
      %p87 = scmp.eq.s32.totalorder %s20, 0
      %p88 = por %p86, %p87
      %p89 = scmp.ne.s32.totalorder %s77, %s78
      %p90 = scmp.eq.s32.totalorder %s21, 1
      %p91 = por %p89, %p90
      %p93 = scmp.ne.s32.totalorder %s78, %s92
      %p94 = scmp.eq.s32.totalorder %s21, 0
      %p95 = por %p93, %p94
      %s97 = sadd.s32 %s96, 1
      %p100 = scmp.eq.s32.totalorder %s15, 1
      %p101 = scmp.ne.s32.totalorder %s96, %s98
      %p102 = scmp.eq.s32.totalorder %s15, 0
      %p103 = por %p101, %p102
      %p104 = scmp.ne.s32.totalorder %s96, %s98
      %p105 = scmp.eq.s32.totalorder %s20, 1
      %p106 = por %p104, %p105
      %p107 = scmp.ne.s32.totalorder %s98, %s99
      %p108 = scmp.eq.s32.totalorder %s20, 0
      %p109 = por %p107, %p108
      %p110 = scmp.ne.s32.totalorder %s98, %s99
      %p111 = scmp.eq.s32.totalorder %s21, 1
      %p112 = por %p110, %p111
      %p114 = scmp.ne.s32.totalorder %s99, %s113
      %p115 = scmp.eq.s32.totalorder %s21, 0
      %p116 = por %p114, %p115
      %s118 = sadd.s32 %s117, 1
      %p121 = scmp.eq.s32.totalorder %s15, 1
      %p122 = scmp.ne.s32.totalorder %s117, %s119
      %p123 = scmp.eq.s32.totalorder %s15, 0
      %p124 = por %p122, %p123
      %p125 = scmp.ne.s32.totalorder %s117, %s119
      %p126 = scmp.eq.s32.totalorder %s20, 1
      %p127 = por %p125, %p126
      %p128 = scmp.ne.s32.totalorder %s119, %s120
      %p129 = scmp.eq.s32.totalorder %s20, 0
      %p130 = por %p128, %p129
      %p131 = scmp.ne.s32.totalorder %s119, %s120
      %p132 = scmp.eq.s32.totalorder %s21, 1
      %p133 = por %p131, %p132
      %p135 = scmp.ne.s32.totalorder %s120, %s134
      %p136 = scmp.eq.s32.totalorder %s21, 0
      %p137 = por %p135, %p136
      %s139 = sadd.s32 %s138, 1
      %p142 = scmp.eq.s32.totalorder %s15, 1
      %p143 = scmp.ne.s32.totalorder %s138, %s140
      %p144 = scmp.eq.s32.totalorder %s15, 0
      %p145 = por %p143, %p144
      %p146 = scmp.ne.s32.totalorder %s138, %s140
      %p147 = scmp.eq.s32.totalorder %s20, 1
      %p148 = por %p146, %p147
      %p149 = scmp.ne.s32.totalorder %s140, %s141
      %p150 = scmp.eq.s32.totalorder %s20, 0
      %p151 = por %p149, %p150
      %p152 = scmp.ne.s32.totalorder %s140, %s141
      %p153 = scmp.eq.s32.totalorder %s21, 1
      %p154 = por %p152, %p153
      %p156 = scmp.ne.s32.totalorder %s141, %s155
      %p157 = scmp.eq.s32.totalorder %s21, 0
      %p158 = por %p156, %p157
      %s159 = ssub.s32 %s15, %s22
      %p160 = scmp.eq.s32.totalorder %s159, 0
      %s162 = sadd.s32 %s161, 1
      %s163 = scalar_select %p160, %s161, %s162
      %p166 = pneg %p160
      %p167 = scmp.eq.s32.totalorder %s15, 1
      %p168 = por %p166, %p167
      %p169 = scmp.ne.s32.totalorder %s161, %s164
      %p170 = scmp.eq.s32.totalorder %s15, 0
      %p171 = por %p169, %p170
      %p172 = scmp.ne.s32.totalorder %s161, %s164
      %p173 = scmp.eq.s32.totalorder %s20, 1
      %p174 = por %p172, %p173
      %p175 = scmp.ne.s32.totalorder %s164, %s165
      %p176 = scmp.eq.s32.totalorder %s20, 0
      %p177 = por %p175, %p176
      %p178 = scmp.ne.s32.totalorder %s164, %s165
      %p179 = scmp.eq.s32.totalorder %s21, 1
      %p180 = por %p178, %p179
      %p182 = scmp.ne.s32.totalorder %s165, %s181
      %p183 = scmp.eq.s32.totalorder %s21, 0
      %p184 = por %p182, %p183
      %p185 = scmp.le.s32.totalorder 1, %s15
      %p186 = scmp.lt.s32.totalorder %s15, 3
      %p187 = pnand %p185, %p186
      %p188 = pneg %p187
      // Predicated region
      $region9: #{tpu_custom_call.1} parent=5 // pred_check
        _
      $region10: #{tpu_custom_call.1} parent=5 // pred_check_branch
        %190 = sbr.rel (%p187) target = $region12
      $region11: #{tpu_custom_call.1} parent=5 // pred_region
        %s191 = ssub.s32 %s15, 1
        // Predicated region
        $region13: #{tpu_custom_call.1} parent=11 // pred_check
          %p192 = pneg %p88
        $region14: #{tpu_custom_call.1} parent=11 // pred_check_branch
          %194 = sbr.rel (%p192) target = $region16
        $region15: #{tpu_custom_call.1} parent=11 // pred_region
          _
        $region16: #{tpu_custom_call.1} parent=11 // pred_fallthru
          _
        // Predicated region
        $region17: #{tpu_custom_call.1} parent=11 // pred_check
          %p195 = pneg %p109
        $region18: #{tpu_custom_call.1} parent=11 // pred_check_branch
          %197 = sbr.rel (%p195) target = $region20
        $region19: #{tpu_custom_call.1} parent=11 // pred_region
          _
        $region20: #{tpu_custom_call.1} parent=11 // pred_fallthru
          _
        // Predicated region
        $region21: #{tpu_custom_call.1} parent=11 // pred_check
          %p198 = pneg %p130
        $region22: #{tpu_custom_call.1} parent=11 // pred_check_branch
          %200 = sbr.rel (%p198) target = $region24
        $region23: #{tpu_custom_call.1} parent=11 // pred_region
          _
        $region24: #{tpu_custom_call.1} parent=11 // pred_fallthru
          _
        // Predicated region
        $region25: #{tpu_custom_call.1} parent=11 // pred_check
          %p201 = pneg %p151
        $region26: #{tpu_custom_call.1} parent=11 // pred_check_branch
          %203 = sbr.rel (%p201) target = $region28
        $region27: #{tpu_custom_call.1} parent=11 // pred_region
          _
        $region28: #{tpu_custom_call.1} parent=11 // pred_fallthru
          _
      $region12: #{tpu_custom_call.1} parent=5 // pred_fallthru
        _
      %p204 = scmp.lt.s32.totalorder %s15, 2
      // Predicated region
      $region29: #{tpu_custom_call.1} parent=5 // pred_check
        %p205 = pneg %p204
      $region30: #{tpu_custom_call.1} parent=5 // pred_check_branch
        %207 = sbr.rel (%p205) target = $region32
      $region31: #{tpu_custom_call.1} parent=5 // pred_region
        // Predicated region
        $region33: #{tpu_custom_call.1} parent=31 // pred_check
          %p208 = pneg %p35
        $region34: #{tpu_custom_call.1} parent=31 // pred_check_branch
          %210 = sbr.rel (%p208) target = $region36
        $region35: #{tpu_custom_call.1} parent=31 // pred_region
          %p211 = scmp.lt.s32.totalorder %s15, 1
          %s212 = scalar_select %p211, %s15, 1
          %s213 = smul.addr %s212, 8
          %s214 = scalar_lea.vmem %s0, %s213
        $region36: #{tpu_custom_call.1} parent=31 // pred_fallthru
          _
        // Predicated region
        $region37: #{tpu_custom_call.1} parent=31 // pred_check
          %p215 = pneg %p61
        $region38: #{tpu_custom_call.1} parent=31 // pred_check_branch
          %217 = sbr.rel (%p215) target = $region40
        $region39: #{tpu_custom_call.1} parent=31 // pred_region
          %p218 = scmp.lt.s32.totalorder %s15, 1
          %s219 = scalar_select %p218, %s15, 1
          %s220 = scalar_lea.vmem %s1, %s219
        $region40: #{tpu_custom_call.1} parent=31 // pred_fallthru
          _
      $region32: #{tpu_custom_call.1} parent=5 // pred_fallthru
        _
      %p221 = scmp.le.s32.totalorder 1, %s15
      %p222 = scmp.lt.s32.totalorder %s15, 3
      %p223 = pnand %p221, %p222
      %p224 = pneg %p223
      // Predicated region
      $region41: #{tpu_custom_call.1} parent=5 // pred_check
        _
      $region42: #{tpu_custom_call.1} parent=5 // pred_check_branch
        %226 = sbr.rel (%p223) target = $region44
      $region43: #{tpu_custom_call.1} parent=5 // pred_region
        %s227 = ssub.s32 %s15, 1
        %p228 = scmp.lt.s32.totalorder %s20, 1
        %s229 = scalar_select %p228, %s20, 1
        %s230 = smul.addr %s229, 8
        %s231 = scalar_lea.vmem %s0, %s230
        %p232 = pneg %p41
        %p233 = pneg %p38
        %p234 = scmp.lt.s32.totalorder %s20, 1
        %s235 = scalar_select %p234, %s20, 1
        %s236 = scalar_lea.vmem %s1, %s235
        %p237 = pneg %p67
        %p238 = pneg %p64
        %p239 = pneg %p88
        %p240 = pneg %p85
        %p241 = pneg %p109
        %p242 = pneg %p106
        %p243 = pneg %p130
        %p244 = pneg %p127
        %p245 = pneg %p151
        %p246 = pneg %p148
        %p247 = pneg %p177
        %p248 = pneg %p174
        %s249 = sand.u32 %s164, 1
        %s250 = scalar_lea.sflag [#allocation3], %s249
        %s251 = sand.u32 %s164, 1
        %s252 = smul.addr %s251, 8
        %s253 = scalar_lea.vmem [#allocation2], %s252
        %p254 = scmp.lt.s32.totalorder %s20, 1
        %s255 = scalar_select %p254, %s20, 1
        %s256 = smul.addr %s255, 8
        %s257 = scalar_lea.vmem %s0, %s256
        %p258 = scmp.lt.s32.totalorder %s20, 1
        %s259 = scalar_select %p258, %s20, 1
        %s260 = scalar_lea.vmem %s1, %s259
        %v261 = vld [vmem:[%s257] sm:$0xff]
        %vm262 = vcmask 261120
        %v263 = vsel %vm262, %v261, 0.0
        %v264 = vrot.slane %v263, 4
        %v265 = vadd.f32 %v263, %v264
        %v266 = vrot.slane %v265, 2
        %v267 = vadd.f32 %v265, %v266
        %v268 = vrot.slane %v267, 1
        %v269 = vadd.f32 %v267, %v268
        %v270 = vsub.f32 %v269, %v261
        %v272 = vrot.slane %v261, 1
        %v274 = vsub.f32 %v270, %v272
        %v276 = vrot.slane %v270, 1
        %277 = vrot.lane.b32.xlu0 %v276, 32
        %v278 = vpop.permute.xlu0 %277
        %281 = vrot.lane.b32.xlu0 %v269, 64
        %v282 = vpop.permute.xlu0 %281
        %v284 = vrot.slane %v270, 2
        %285 = vrot.lane.b32.xlu0 %v284, 96
        %v286 = vpop.permute.xlu0 %285
        %v289 = vrot.slane %v274, 2
        %v290 = vsel %vm262, %v274, %v278
        %vm291 = vcmask 523264
        %v292 = vsel %vm291, %v290, %v282
        %vm293 = vcmask 785408
        %v294 = vsel %vm293, %v292, %v286
        %v295 = vld [vmem:[%s260] sm:$0x1]
        %v296 = vld [vmem:[%s2] sm:$0xff]
        %v297 = vld [vmem:[%s2 + $0x8] sm:$0xff]
        %v298 = vld [vmem:[%s2 + $0x10] sm:$0xff]
        %v299 = vld [vmem:[%s2 + $0x18] sm:$0xff]
        %v300 = vld [vmem:[%s2 + $0x20] sm:$0xff]
        %v301 = vld [vmem:[%s2 + $0x28] sm:$0xff]
        %v302 = vld [vmem:[%s2 + $0x30] sm:$0xff]
        %v303 = vld [vmem:[%s2 + $0x38] sm:$0xff]
        %v304 = vld [vmem:[%s2 + $0x40] sm:$0xff]
        %v305 = vld [vmem:[%s2 + $0x48] sm:$0xff]
        %v306 = vld [vmem:[%s2 + $0x50] sm:$0xff]
        %v307 = vld [vmem:[%s2 + $0x58] sm:$0xff]
        %v308 = vld [vmem:[%s2 + $0x60] sm:$0xff]
        %v309 = vld [vmem:[%s2 + $0x68] sm:$0xff]
        %v310 = vld [vmem:[%s2 + $0x70] sm:$0xff]
        %v311 = vld [vmem:[%s2 + $0x78] sm:$0xff]
        %v312 = vld [vmem:[%s2 + $0x80] sm:$0xff]
        %v313 = vld [vmem:[%s2 + $0x88] sm:$0xff]
        %v314 = vld [vmem:[%s2 + $0x90] sm:$0xff]
        %v315 = vld [vmem:[%s2 + $0x98] sm:$0xff]
        %v316 = vld [vmem:[%s3] sm:$0x1]
        %v317 = vld [vmem:[%s4] sm:$0xff]
        %v318 = vld [vmem:[%s4 + $0x8] sm:$0xff]
        %v319 = vld [vmem:[%s4 + $0x10] sm:$0xff]
        %v320 = vld [vmem:[%s4 + $0x18] sm:$0xff]
        %v321 = vld [vmem:[%s5] sm:$0x1]
        %v323 = vrot.slane %v294, 6
        %v324 = vrot.slane %v289, 6
        %v326 = vsel %vm262, %v324, 0
        %328 = vmatprep.subr.mxu0 0.0
        %329 = vmatpush1.msra.mxu0 %v296
        %330 = vmatprep.subr.mxu0 0.0
        %331 = vmatpush1.msra.mxu0 %v297
        %332 = vmatprep.subr.mxu0 0.0
        %333 = vmatpush1.msra.mxu0 %v298
        %334 = vmatprep.subr.mxu0 0.0
        %335 = vmatpush1.msra.mxu0 %v299
        %336 = vmatprep.subr.mxu0 0.0
        %337 = vmatpush1.msra.mxu0 %v300
        %338 = vmatprep.subr.mxu0 0.0
        %339 = vmatpush1.msra.mxu0 %v301
        %340 = vmatprep.subr.mxu0 0.0
        %341 = vmatpush1.msra.mxu0 %v302
        %342 = vmatprep.subr.mxu0 0.0
        %343 = vmatpush1.msra.mxu0 %v303
        %344 = vmatprep.subr.mxu0 0.0
        %345 = vmatpush1.msra.mxu0 %v304
        %346 = vmatprep.subr.mxu0 0.0
        %347 = vmatpush1.msra.mxu0 %v305
        %348 = vmatprep.subr.mxu0 0.0
        %349 = vmatpush1.msra.mxu0 %v306
        %350 = vmatprep.subr.mxu0 0.0
        %351 = vmatpush1.msra.mxu0 %v307
        %352 = vmatprep.subr.mxu0 0.0
        %353 = vmatpush1.msra.mxu0 %v308
        %354 = vmatprep.subr.mxu0 0.0
        %355 = vmatpush1.msra.mxu0 %v309
        %356 = vmatprep.subr.mxu0 0.0
        %357 = vmatpush1.msra.mxu0 %v310
        %358 = vmatprep.subr.mxu0 0.0
        %359 = vmatpush1.msra.mxu0 %v311
        %360 = vmatprep.subr.mxu0 0.0
        %361 = vmatpush1.msra.mxu0 %v312
        %362 = vmatprep.subr.mxu0 0.0
        %363 = vmatpush1.msra.mxu0 %v313
        %364 = vmatprep.subr.mxu0 0.0
        %365 = vmatpush1.msra.mxu0 %v314
        %366 = vmatprep.subr.mxu0 0.0
        %367 = vmatpush1.msra.mxu0 %v315
        %368 = vmatprep.subr.mxu0 0.0
        %369 = vmatpush1.msra.mxu0 0.0
        %370 = vmatprep.subr.mxu0 0.0
        %371 = vmatpush1.msra.mxu0 0.0
        %372 = vmatprep.subr.mxu0 0.0
        %373 = vmatpush1.msra.mxu0 0.0
        %374 = vmatprep.subr.mxu0 0.0
        %375 = vmatpush1.msra.mxu0 0.0
        %376 = vmatprep.subr.mxu0 0.0
        %377 = vmatpush1.msra.mxu0 0.0
        %378 = vmatprep.subr.mxu0 0.0
        %379 = vmatpush1.msra.mxu0 0.0
        %380 = vmatprep.subr.mxu0 0.0
        %381 = vmatpush1.msra.mxu0 0.0
        %382 = vmatprep.subr.mxu0 0.0
        %383 = vmatpush1.msra.mxu0 0.0
        %384 = vmatprep.subr.mxu0 0.0
        %385 = vmatpush1.msra.mxu0 0.0
        %386 = vmatprep.subr.mxu0 0.0
        %387 = vmatpush1.msra.mxu0 0.0
        %388 = vmatprep.subr.mxu0 0.0
        %389 = vmatpush1.msra.mxu0 0.0
        %390 = vmatprep.subr.mxu0 0.0
        %391 = vmatpush1.msra.mxu0 0.0
        %392 = vmatprep.mubr.f32.mxu0 %v326
        %393 = vmatmul.mubr.f32.gmra.mrb[0].mxu0 %v323
        %v394 = vpop.f32.mrb[0].mxu0
        %v395 = vadd.f32 0.0, %v394
        %v396 = vpop.f32.mrb[0].mxu0
        %397 = vdwg.mxu0
        %v398 = vmul.f32 %v395, 0.125
        %v399 = vadd.f32 %v398, %v316
        %v400 = vadd.f32 %v295, %v399
        %vm401 = vcmp.gt.f32.partialorder %v400, 20.0
        %v402 = vmin.f32 %v400, 20.0
        %v403 = vmul.f32 %v402, 1.442695
        %v404 = vpow.pop %v403
        %v405 = vadd.f32 %v404, 1.0
        %v406 = vlog2.pop %v405
        %v407 = vmul.f32 %v406, 0.6931472
        %v408 = vmul.f32 -0.5, %v404
        %v409 = vadd.f32 %v408, 1.0
        %v410 = vmul.f32 %v409, %v404
        %v411 = vand.u32 2147483647, %v404
        %vm412 = vcmp.lt.f32.partialorder %v411, 0.0004427343
        %v413 = vsel %vm412, %v410, %v407
        %v414 = vsel %vm401, %v400, %v413
        %v415 = vtanh.pop %v414
        %v416 = vmul.f32 %v400, %v415
        %v418 = vsel %vm262, %v416, 0
        %420 = vmatprep.subr.mxu0 0.0
        %421 = vmatpush1.msra.mxu0 %v317
        %422 = vmatprep.subr.mxu0 0.0
        %423 = vmatpush1.msra.mxu0 %v318
        %424 = vmatprep.subr.mxu0 0.0
        %425 = vmatpush1.msra.mxu0 %v319
        %426 = vmatprep.subr.mxu0 0.0
        %427 = vmatpush1.msra.mxu0 %v320
        %428 = vmatprep.subr.mxu0 0.0
        %429 = vmatpush1.msra.mxu0 0.0
        %430 = vmatprep.subr.mxu0 0.0
        %431 = vmatpush1.msra.mxu0 0.0
        %432 = vmatprep.subr.mxu0 0.0
        %433 = vmatpush1.msra.mxu0 0.0
        %434 = vmatprep.subr.mxu0 0.0
        %435 = vmatpush1.msra.mxu0 0.0
        %436 = vmatprep.subr.mxu0 0.0
        %437 = vmatpush1.msra.mxu0 0.0
        %438 = vmatprep.subr.mxu0 0.0
        %439 = vmatpush1.msra.mxu0 0.0
        %440 = vmatprep.subr.mxu0 0.0
        %441 = vmatpush1.msra.mxu0 0.0
        %442 = vmatprep.subr.mxu0 0.0
        %443 = vmatpush1.msra.mxu0 0.0
        %444 = vmatprep.subr.mxu0 0.0
        %445 = vmatpush1.msra.mxu0 0.0
        %446 = vmatprep.subr.mxu0 0.0
        %447 = vmatpush1.msra.mxu0 0.0
        %448 = vmatprep.subr.mxu0 0.0
        %449 = vmatpush1.msra.mxu0 0.0
        %450 = vmatprep.subr.mxu0 0.0
        %451 = vmatpush1.msra.mxu0 0.0
        %452 = vmatprep.subr.mxu0 0.0
        %453 = vmatpush1.msra.mxu0 0.0
        %454 = vmatprep.subr.mxu0 0.0
        %455 = vmatpush1.msra.mxu0 0.0
        %456 = vmatprep.subr.mxu0 0.0
        %457 = vmatpush1.msra.mxu0 0.0
        %458 = vmatprep.subr.mxu0 0.0
        %459 = vmatpush1.msra.mxu0 0.0
        %460 = vmatprep.subr.mxu0 0.0
        %461 = vmatpush1.msra.mxu0 0.0
        %462 = vmatprep.subr.mxu0 0.0
        %463 = vmatpush1.msra.mxu0 0.0
        %464 = vmatprep.subr.mxu0 0.0
        %465 = vmatpush1.msra.mxu0 0.0
        %466 = vmatprep.subr.mxu0 0.0
        %467 = vmatpush1.msra.mxu0 0.0
        %468 = vmatprep.subr.mxu0 0.0
        %469 = vmatpush1.msra.mxu0 0.0
        %470 = vmatprep.subr.mxu0 0.0
        %471 = vmatpush1.msra.mxu0 0.0
        %472 = vmatprep.subr.mxu0 0.0
        %473 = vmatpush1.msra.mxu0 0.0
        %474 = vmatprep.subr.mxu0 0.0
        %475 = vmatpush1.msra.mxu0 0.0
        %476 = vmatprep.subr.mxu0 0.0
        %477 = vmatpush1.msra.mxu0 0.0
        %478 = vmatprep.subr.mxu0 0.0
        %479 = vmatpush1.msra.mxu0 0.0
        %480 = vmatprep.subr.mxu0 0.0
        %481 = vmatpush1.msra.mxu0 0.0
        %482 = vmatprep.subr.mxu0 0.0
        %483 = vmatpush1.msra.mxu0 0.0
        %484 = vmatprep.mubr.f32.mxu0 0.0
        %485 = vmatmul.mubr.f32.gmra.mrb[0].mxu0 %v418
        %v486 = vpop.f32.mrb[0].mxu0
        %v487 = vadd.f32 %v321, %v486
        %v488 = vpop.f32.mrb[0].mxu0
        %489 = vdwg.mxu0
        %v490 = vadd.f32 %v487, 1.0
        %v491 = vlaneseq
        %v492 = vshrl.u32 %v491, 7
        %v493 = vsub.s32 0, %v492
        %v494 = vrot.slane %v490, %v493
        %v495 = vmul.f32 %v494, %v261
        %v496 = vlaneseq
        %v497 = vshrl.u32 %v496, 7
        %v498 = vsub.s32 0, %v497
        %v499 = vrot.slane %v487, %v498
        %501 = vrot.lane.b32.xlu0 %v499, 96
        %v502 = vpop.permute.xlu0 %501
        %v504 = vadd.f32 %v495, %v502
        %505 = vst.msk [vmem:[%s253] sm:$0xff] %vm262, %v504
        %s506 = sand.u32 %s164, 1
        %s507 = scalar_lea.sflag [#allocation3], %s506
        %s508 = sand.u32 %s164, 1
        %s509 = smul.addr %s508, 8
        %s510 = scalar_lea.vmem [#allocation2], %s509
        // Predicated region
        $region45: #{tpu_custom_call.1} parent=43 // pred_check
          %p511 = pneg %p174
        $region46: #{tpu_custom_call.1} parent=43 // pred_check_branch
          %513 = sbr.rel (%p511) target = $region48
        $region47: #{tpu_custom_call.1} parent=43 // pred_region
          %s515 = ssub.s32 128, 128
          %516 = vsyncadd %s507, %s515
          %s517 = smul.addr %s20, 128
          %s518 = scalar_lea.hbm %s6, %s517
          %s520 = sshll.u32 %s510, 4
          %s521 = int_to_ptr.vmem [resolvable:$true] %s520
          %523 = dma.vmem_to_hbm [thread:$0]  %s521, 128, %s518, %s507
        $region48: #{tpu_custom_call.1} parent=43 // pred_fallthru
          _
      $region44: #{tpu_custom_call.1} parent=5 // pred_fallthru
        _
      %p524 = scmp.le.s32.totalorder 2, %s15
      // Predicated region
      $region49: #{tpu_custom_call.1} parent=5 // pred_check
        %p525 = pneg %p524
      $region50: #{tpu_custom_call.1} parent=5 // pred_check_branch
        %527 = sbr.rel (%p525) target = $region52
      $region51: #{tpu_custom_call.1} parent=5 // pred_region
        %s528 = ssub.s32 %s15, 2
        // Predicated region
        $region53: #{tpu_custom_call.1} parent=51 // pred_check
          %p529 = pneg %p180
        $region54: #{tpu_custom_call.1} parent=51 // pred_check_branch
          %531 = sbr.rel (%p529) target = $region56
        $region55: #{tpu_custom_call.1} parent=51 // pred_region
          %s532 = sand.u32 %s165, 1
          %s533 = scalar_lea.sflag [#allocation3], %s532
          %s534 = sand.u32 %s165, 1
          %s535 = smul.addr %s534, 8
          %s536 = scalar_lea.vmem [#allocation2], %s535
          %537 = dma.done %s533, 128
        $region56: #{tpu_custom_call.1} parent=51 // pred_fallthru
          _
      $region52: #{tpu_custom_call.1} parent=5 // pred_fallthru
        _
    $region6: #{tpu_custom_call.1} parent=1 // loop_footer
      %s19 = sadd.s32 1, %s15
    $region7: #{tpu_custom_call.1} parent=1 // loop_footer_branch
      %14 = sbr.rel target = $region3
    $region8: #{tpu_custom_call.1} parent=1 // loop_exit
      _
    %538 = vsyncpa [#allocation3], 1
    %s539 = scalar_lea.sflag [#allocation3], 1
    %540 = vsyncpa %s539, 1

</llo_original>
